<compile_context>
chip_gen: v5e
topology: v5e:2x2
jax: 0.10.0
libtpu: 0.0.40
codegen_flags: <defaults>
</compile_context>

<pallas_src>
import functools

import jax
import jax.numpy as jnp
from jax.experimental import pallas as pl
from jax.experimental.pallas import tpu as pltpu


def _round_up(x: int, m: int) -> int:
    return ((x + m - 1) // m) * m


def _choose_tile(desired: int, dim: int, align: int):
    """Largest tile that is a multiple of `align` and divides round_up(dim, align).

    Guarantees padding never exceeds the alignment boundary (no gross pad copies).
    """
    dim_a = _round_up(dim, align)
    t = min(_round_up(desired, align), dim_a)
    while dim_a % t != 0:
        t -= align
    return t, dim_a


def _dense_relu_kernel_single_k(x_ref, w_ref, b_ref, o_ref):
    """Whole-K output tile: o = relu(x @ w + b), no accumulator round-trip.

    x_ref: (tm, K)  w_ref: (K, tn)  b_ref: (1, tn) f32  o_ref: (tm, tn)
    """
    out = jnp.dot(x_ref[...], w_ref[...], preferred_element_type=jnp.float32)
    out = out + b_ref[...]                       # (1, tn) broadcasts over rows
    o_ref[...] = jnp.maximum(out, 0.0).astype(o_ref.dtype)


def _dense_relu_kernel_multi_k(x_ref, w_ref, b_ref, o_ref, acc_ref):
    """K-tiled output tile with f32 VMEM accumulator; epilogue fused into the
    last K step (no extra acc store + reload on the final step).

    x_ref: (tm, tk)  w_ref: (tk, tn)  b_ref: (1, tn) f32
    o_ref: (tm, tn)  acc_ref: (tm, tn) f32 scratch (resident across K axis)
    """
    k = pl.program_id(2)
    nk = pl.num_programs(2)

    part = jnp.dot(x_ref[...], w_ref[...], preferred_element_type=jnp.float32)

    @pl.when(k == 0)
    def _():
        acc_ref[...] = part

    @pl.when(jnp.logical_and(k > 0, k < nk - 1))
    def _():
        acc_ref[...] = acc_ref[...] + part

    @pl.when(k == nk - 1)
    def _():
        out = acc_ref[...] + part + b_ref[...]
        o_ref[...] = jnp.maximum(out, 0.0).astype(o_ref.dtype)


@functools.partial(
    jax.jit, static_argnames=("tm", "tn", "tk", "compute_dtype", "out_dtype")
)
def base_module_forward(
    x,
    w,
    b,
    *,
    tm=256,
    tn=512,
    tk=512,
    compute_dtype=jnp.bfloat16,
    out_dtype=jnp.float32,
):
    """Pallas forward: relu(x @ w + b).

    x: (B, D_in)   w: (D_in, D_out)   b: (D_out,)   ->   (B, D_out) out_dtype.

    bf16 operands by default (v5e/v6e/v7x MXU-native) with f32 accumulation and
    a fused f32 bias+relu epilogue.  Pass compute_dtype=jnp.float32 when full
    precision is required, or pre-cast x/w to bf16 to skip the wrapper cast.
    """
    B, D_in = x.shape
    D_out = w.shape[1]

    compute_dtype = jnp.dtype(compute_dtype)
    out_dtype = jnp.dtype(out_dtype)

    # Cast only if needed (callers can pass pre-cast operands to avoid the
    # extra HBM read/write entirely).
    if x.dtype != compute_dtype:
        x = x.astype(compute_dtype)
    if w.dtype != compute_dtype:
        w = w.astype(compute_dtype)

    # Sublane granule for the M tile: 8 rows (f32), 16 (bf16), 32 (8-bit).
    m_align = max(8, 32 // max(1, compute_dtype.itemsize))

    tm, Mp = _choose_tile(tm, B, m_align)
    tn, Np = _choose_tile(tn, D_out, 128)
    tk, Kp = _choose_tile(tk, D_in, 128)

    # Dual-TensorCore chips (v7x): ensure the 'parallel' (i, j) grid has at
    # least 2 blocks so the second core is not idle.
    if (Mp // tm) * (Np // tn) == 1:
        if tn >= 256:
            tn //= 2
        elif tm >= 2 * m_align:
            tm //= 2

    # Padding only to the alignment boundary (zeros are neutral for
    # matmul / bias / relu; padded rows/cols are sliced off below).
    xp = x if (Mp == B and Kp == D_in) else jnp.pad(x, ((0, Mp - B), (0, Kp - D_in)))
    wp = (
        w
        if (Kp == D_in and Np == D_out)
        else jnp.pad(w, ((0, Kp - D_in), (0, Np - D_out)))
    )
    bp = b.reshape(1, D_out).astype(jnp.float32)
    if Np != D_out:
        bp = jnp.pad(bp, ((0, 0), (0, Np - D_out)))

    nk = Kp // tk

    # Explicit VMEM budget (double-buffered input tiles + output + bias + acc),
    # clamped to a value safe on every generation (v7x has 64 MiB physical).
    in_item = compute_dtype.itemsize
    vmem_est = (
        2 * (tm * tk + tk * tn) * in_item
        + 2 * tn * 4
        + 2 * tm * tn * out_dtype.itemsize
        + (tm * tn * 4 if nk > 1 else 0)
    )
    vmem_limit = int(min(64 * 2**20, max(32 * 2**20, 2 * vmem_est)))

    if nk == 1:
        out = pl.pallas_call(
            _dense_relu_kernel_single_k,
            out_shape=jax.ShapeDtypeStruct((Mp, Np), out_dtype),
            grid=(Mp // tm, Np // tn),
            in_specs=[
                pl.BlockSpec((tm, tk), lambda i, j: (i, 0)),   # x tile
                pl.BlockSpec((tk, tn), lambda i, j: (0, j)),   # w tile
                pl.BlockSpec((1, tn), lambda i, j: (0, j)),    # bias tile
            ],
            out_specs=pl.BlockSpec((tm, tn), lambda i, j: (i, j)),
            compiler_params=pltpu.CompilerParams(
                dimension_semantics=("parallel", "parallel"),
                vmem_limit_bytes=vmem_limit,
            ),
        )(xp, wp, bp)
    else:
        out = pl.pallas_call(
            _dense_relu_kernel_multi_k,
            out_shape=jax.ShapeDtypeStruct((Mp, Np), out_dtype),
            grid=(Mp // tm, Np // tn, nk),
            in_specs=[
                pl.BlockSpec((tm, tk), lambda i, j, k: (i, k)),   # x tile
                pl.BlockSpec((tk, tn), lambda i, j, k: (k, j)),   # w tile
                pl.BlockSpec((1, tn), lambda i, j, k: (0, j)),    # bias tile
            ],
            out_specs=pl.BlockSpec((tm, tn), lambda i, j, k: (i, j)),
            scratch_shapes=[pltpu.VMEM((tm, tn), jnp.float32)],
            compiler_params=pltpu.CompilerParams(
                dimension_semantics=("parallel", "parallel", "arbitrary"),
                vmem_limit_bytes=vmem_limit,
            ),
        )(xp, wp, bp)

    if Mp != B or Np != D_out:
        out = out[:B, :D_out]
    return out


if __name__ == "__main__":
    key = jax.random.PRNGKey(0)
    kx, kw, kb, kx2, kw2, kb2, kx3, kw3, kb3 = jax.random.split(key, 9)

    # --- Small shapes consistent with a minimal ANN dense forward. ---
    B, D_in, D_out = 8, 32, 32
    x = jax.random.normal(kx, (B, D_in), dtype=jnp.float32)
    w = jax.random.normal(kw, (D_in, D_out), dtype=jnp.float32) * (1.0 / jnp.sqrt(D_in))
    b = jax.random.normal(kb, (D_out,), dtype=jnp.float32) * 0.01

    # Default path: bf16 MXU operands, f32 accumulation / epilogue, f32 output.
    y = jax.block_until_ready(base_module_forward(x, w, b))
    y_ref = jnp.maximum(
        jnp.dot(
            x.astype(jnp.bfloat16), w.astype(jnp.bfloat16),
            preferred_element_type=jnp.float32,
        )
        + b[None, :],
        0.0,
    )
    assert jnp.allclose(y, y_ref, atol=2e-2, rtol=2e-2), "mismatch (small, bf16 default)"

    # Full-precision path for accuracy-sensitive use.
    y32 = jax.block_until_ready(base_module_forward(x, w, b, compute_dtype=jnp.float32))
    y32_ref = jnp.maximum(x @ w + b[None, :], 0.0)
    assert jnp.allclose(y32, y32_ref, atol=1e-5, rtol=1e-5), "mismatch (small, f32)"

    # --- Wider layer: single-K fast path + >=2 parallel (i, j) blocks. ---
    B2, K2, N2 = 256, 384, 512
    x2 = jax.random.normal(kx2, (B2, K2), dtype=jnp.float32)
    w2 = jax.random.normal(kw2, (K2, N2), dtype=jnp.float32) * (1.0 / jnp.sqrt(K2))
    b2 = jax.random.normal(kb2, (N2,), dtype=jnp.float32) * 0.01

    y2 = jax.block_until_ready(base_module_forward(x2, w2, b2))
    y2_ref = jnp.maximum(
        jnp.dot(
            x2.astype(jnp.bfloat16), w2.astype(jnp.bfloat16),
            preferred_element_type=jnp.float32,
        )
        + b2[None, :],
        0.0,
    )
    assert jnp.allclose(y2, y2_ref, atol=2e-2, rtol=2e-2), "mismatch (wide, bf16)"

    # --- Deeper layer: exercises the multi-K accumulator kernel (nk = 2). ---
    B3, K3, N3 = 256, 1024, 512
    x3 = jax.random.normal(kx3, (B3, K3), dtype=jnp.float32)
    w3 = jax.random.normal(kw3, (K3, N3), dtype=jnp.float32) * (1.0 / jnp.sqrt(K3))
    b3 = jax.random.normal(kb3, (N3,), dtype=jnp.float32) * 0.01

    y3 = jax.block_until_ready(base_module_forward(x3, w3, b3))
    y3_ref = jnp.maximum(
        jnp.dot(
            x3.astype(jnp.bfloat16), w3.astype(jnp.bfloat16),
            preferred_element_type=jnp.float32,
        )
        + b3[None, :],
        0.0,
    )
    assert jnp.allclose(y3, y3_ref, atol=2e-2, rtol=2e-2), "mismatch (deep, bf16 multi-K)"

    # bf16 output writeback (halves C-store bytes; most useful on v5e).
    y3b = jax.block_until_ready(
        base_module_forward(x3, w3, b3, out_dtype=jnp.bfloat16)
    )
    assert y3b.dtype == jnp.bfloat16
    assert jnp.allclose(
        y3b.astype(jnp.float32), y3, atol=5e-2, rtol=5e-2
    ), "mismatch (bf16 output)"

    print("KERNEL_OK")
</pallas_src>

<mosaic_0001>
module attributes {stable_mosaic.version = 11 : i64} {
  func.func @_dense_relu_kernel_single_k(%arg0: i32, %arg1: i32, %arg2: memref<16x128xbf16, #tpu.memory_space<vmem>>, %arg3: memref<128x128xbf16, #tpu.memory_space<vmem>>, %arg4: memref<1x128xf32, #tpu.memory_space<vmem>>, %arg5: memref<16x128xf32, #tpu.memory_space<vmem>>) attributes {dimension_semantics = [#tpu.dimension_semantics<parallel>, #tpu.dimension_semantics<parallel>], iteration_bounds = array<i64: 1, 1>, scalar_prefetch = 0 : i64, scratch_operands = 0 : i64, tpu.core_type = #tpu.core_type<tc>, window_params = [{transform_indices = @transform_0, window_bounds = array<i64: 16, 128>}, {transform_indices = @transform_1, window_bounds = array<i64: 128, 128>}, {transform_indices = @transform_2, window_bounds = array<i64: 1, 128>}, {transform_indices = @transform_3, window_bounds = array<i64: 16, 128>}]} {
    %c0 = arith.constant 0 : index
    %c0_0 = arith.constant 0 : index
    %0 = vector.load %arg2[%c0, %c0_0] : memref<16x128xbf16, #tpu.memory_space<vmem>>, vector<16x128xbf16>
    %c0_1 = arith.constant 0 : index
    %c0_2 = arith.constant 0 : index
    %1 = vector.load %arg3[%c0_1, %c0_2] : memref<128x128xbf16, #tpu.memory_space<vmem>>, vector<128x128xbf16>
    %cst = arith.constant dense<0.000000e+00> : vector<16x128xf32>
    %2 = tpu.matmul %0, %1, %cst {dimension_numbers = #tpu.dot_dimension_numbers<[1], [0], [0], [1], [0, 0, 1, 1], [], []>} : vector<16x128xbf16>, vector<128x128xbf16>, vector<16x128xf32> -> vector<16x128xf32>
    %c0_3 = arith.constant 0 : index
    %c0_4 = arith.constant 0 : index
    %3 = vector.load %arg4[%c0_3, %c0_4] : memref<1x128xf32, #tpu.memory_space<vmem>>, vector<1x128xf32>
    %4 = vector.broadcast %3 : vector<1x128xf32> to vector<16x128xf32>
    %5 = arith.addf %2, %4 : vector<16x128xf32>
    %cst_5 = arith.constant 0.000000e+00 : f32
    %6 = vector.broadcast %cst_5 : f32 to vector<16x128xf32>
    %7 = arith.maximumf %5, %6 : vector<16x128xf32>
    %c0_6 = arith.constant 0 : index
    %c0_7 = arith.constant 0 : index
    %8 = vector.load %arg5[%c0_6, %c0_7] : memref<16x128xf32, #tpu.memory_space<vmem>>, vector<16x128xf32>
    tpu.vector_store %arg5[%c0_6, %c0_7], %7 {strides = array<i32>} : memref<16x128xf32, #tpu.memory_space<vmem>>, vector<16x128xf32>,
    return
  }
  func.func @transform_0(%arg0: i32, %arg1: i32) -> (i32, i32) {
    %c0_i32 = arith.constant 0 : i32
    %c0_i32_0 = arith.constant 0 : i32
    return %arg0, %c0_i32 : i32, i32
  }
  func.func @transform_1(%arg0: i32, %arg1: i32) -> (i32, i32) {
    %c0_i32 = arith.constant 0 : i32
    %c0_i32_0 = arith.constant 0 : i32
    return %c0_i32, %arg1 : i32, i32
  }
  func.func @transform_2(%arg0: i32, %arg1: i32) -> (i32, i32) {
    %c0_i32 = arith.constant 0 : i32
    %c0_i32_0 = arith.constant 0 : i32
    return %c0_i32, %arg1 : i32, i32
  }
  func.func @transform_3(%arg0: i32, %arg1: i32) -> (i32, i32) {
    %c0_i32 = arith.constant 0 : i32
    return %arg0, %arg1 : i32, i32
  }
}

</mosaic_0001>

<llo_original>
// kernel: base_module_forward.1
$region0: #{base_module_forward.1}
  #allocation0 [shape = 'u32[]', space=smem, size = 0x4, offset = 0x4, fixed_abs, tag = 'smem constant byte address 0x4 - core index']
  #allocation1 [shape = 'u32[72,128]{1,0:T(1,128)}', space=vmem, size = 0x9000, scoped, tag = 'internal scratch']
  %s0 = inlined_call_operand.vmem [shape: bf16[16,128], index: 0, kind: input, shape index: {}]
  %s1 = inlined_call_operand.vmem [shape: bf16[128,128], index: 1, kind: input, shape index: {}]
  %s2 = inlined_call_operand.vmem [shape: f32[1,128], index: 2, kind: input, shape index: {}]
  %s3 = inlined_call_operand.vmem [shape: f32[16,128], index: 3, kind: output, shape index: {}]
  %s4 = sld [smem:[#allocation0]]
  $region22: #{base_module_forward.1} parent=0
    _
  %s6 = ssub.s32 1, %s4
  %s7 = scalar_select 0, %s6, %s4
  // Predicated region
  $region2: #{base_module_forward.1} parent=0 // pred_check
    _
  $region3: #{base_module_forward.1} parent=0 // pred_check_branch
    %9 = sbr.rel (0) target = $region5
  $region4: #{base_module_forward.1} parent=0 // pred_region
    _
  $region5: #{base_module_forward.1} parent=0 // pred_fallthru
    _
  // Predicated region
  $region6: #{base_module_forward.1} parent=0 // pred_check
    _
  $region7: #{base_module_forward.1} parent=0 // pred_check_branch
    %11 = sbr.rel (0) target = $region9
  $region8: #{base_module_forward.1} parent=0 // pred_region
    _
  $region9: #{base_module_forward.1} parent=0 // pred_fallthru
    _
  // Predicated region
  $region10: #{base_module_forward.1} parent=0 // pred_check
    _
  $region11: #{base_module_forward.1} parent=0 // pred_check_branch
    %13 = sbr.rel (0) target = $region13
  $region12: #{base_module_forward.1} parent=0 // pred_region
    _
  $region13: #{base_module_forward.1} parent=0 // pred_fallthru
    _
  %v14 = vld [vmem:[%s0] sm:$0xf]
  %v15 = vld [vmem:[%s0 + $0x4] sm:$0xf]
  %v16 = vld [vmem:[%s1] sm:$0xf]
  %v17 = vld [vmem:[%s1 + $0x4] sm:$0xf]
  %v18 = vld [vmem:[%s1 + $0x8] sm:$0xf]
  %v19 = vld [vmem:[%s1 + $0xc] sm:$0xf]
  %v20 = vld [vmem:[%s1 + $0x10] sm:$0xf]
  %v21 = vld [vmem:[%s1 + $0x14] sm:$0xf]
  %v22 = vld [vmem:[%s1 + $0x18] sm:$0xf]
  %v23 = vld [vmem:[%s1 + $0x1c] sm:$0xf]
  %v24 = vld [vmem:[%s1 + $0x20] sm:$0xf]
  %v25 = vld [vmem:[%s1 + $0x24] sm:$0xf]
  %v26 = vld [vmem:[%s1 + $0x28] sm:$0xf]
  %v27 = vld [vmem:[%s1 + $0x2c] sm:$0xf]
  %v28 = vld [vmem:[%s1 + $0x30] sm:$0xf]
  %v29 = vld [vmem:[%s1 + $0x34] sm:$0xf]
  %v30 = vld [vmem:[%s1 + $0x38] sm:$0xf]
  %v31 = vld [vmem:[%s1 + $0x3c] sm:$0xf]
  %v32 = vld [vmem:[%s2] sm:$0x1]
  %v34 = vperm.slane %v32, 0
  %v38 = vunpack.c.l.b16 %v14
  %v39 = vunpack.c.l.b16 %v15
  %v40 = vpack.c.b16 %v39, %v38
  %v58 = vunpack.c.l.b16 %v16
  %v59 = vunpack.c.l.b16 %v17
  %v60 = vunpack.c.l.b16 %v18
  %v61 = vunpack.c.l.b16 %v19
  %v62 = vunpack.c.l.b16 %v20
  %v63 = vunpack.c.l.b16 %v21
  %v64 = vunpack.c.l.b16 %v22
  %v65 = vunpack.c.l.b16 %v23
  %v66 = vunpack.c.l.b16 %v24
  %v67 = vunpack.c.l.b16 %v25
  %v68 = vunpack.c.l.b16 %v26
  %v69 = vunpack.c.l.b16 %v27
  %v70 = vunpack.c.l.b16 %v28
  %v71 = vunpack.c.l.b16 %v29
  %v72 = vunpack.c.l.b16 %v30
  %v73 = vunpack.c.l.b16 %v31
  %v74 = vpack.c.b16 %v59, %v58
  %v75 = vpack.c.b16 %v61, %v60
  %v76 = vpack.c.b16 %v63, %v62
  %v77 = vpack.c.b16 %v65, %v64
  %v78 = vpack.c.b16 %v67, %v66
  %v79 = vpack.c.b16 %v69, %v68
  %v80 = vpack.c.b16 %v71, %v70
  %v81 = vpack.c.b16 %v73, %v72
  %90 = vmatpush.bf16.msra.mxu0 %v81
  %91 = vmatpush.bf16.msra.mxu0 %v80
  %92 = vmatpush.bf16.msra.mxu0 %v79
  %93 = vmatpush.bf16.msra.mxu0 %v78
  %94 = vmatpush.bf16.msra.mxu0 %v77
  %95 = vmatpush.bf16.msra.mxu0 %v76
  %96 = vmatpush.bf16.msra.mxu0 %v75
  %97 = vmatpush.bf16.msra.mxu0 %v74
  %98 = vmatmul.bf16.gmra.mxu0 %v40
  %v99 = vpop.f32.mrf.mxu0
  %v100 = vadd.f32 %v34, %v99
  %v101 = vpop.f32.mrf.mxu0
  %v102 = vadd.f32 %v34, %v101
  %103 = vdwg.mxu0
  %v104 = vmax.f32 %v100, 0.0
  %v105 = vmax.f32 %v102, 0.0
  %106 = vst [vmem:[%s3] sm:$0xff] %v104
  %107 = vst [vmem:[%s3 + $0x8] sm:$0xff] %v105
  // Predicated region
  $region14: #{base_module_forward.1} parent=0 // pred_check
    _
  $region15: #{base_module_forward.1} parent=0 // pred_check_branch
    %109 = sbr.rel (0) target = $region17
  $region16: #{base_module_forward.1} parent=0 // pred_region
    _
  $region17: #{base_module_forward.1} parent=0 // pred_fallthru
    _
  // Predicated region
  $region18: #{base_module_forward.1} parent=0 // pred_check
    _
  $region19: #{base_module_forward.1} parent=0 // pred_check_branch
    %111 = sbr.rel (0) target = $region21
  $region20: #{base_module_forward.1} parent=0 // pred_region
    _
  $region21: #{base_module_forward.1} parent=0 // pred_fallthru
    _

</llo_original>
